<compile_context>
chip_gen: v5e
topology: v5e:2x2
jax: 0.10.0
libtpu: 0.0.40
codegen_flags: <defaults>
</compile_context>

<pallas_src>
import jax
import jax.numpy as jnp
from jax.experimental import pallas as pl
from jax.experimental.pallas import tpu as pltpu


def _round_up(x, m):
    return ((x + m - 1) // m) * m


def autoencoder_kernel(x_ref,
                       w1_ref, b1_ref,   # encoder layer 1  (784 -> 128)
                       w2_ref, b2_ref,   # encoder layer 2  (128 -> 32)
                       w3_ref, b3_ref,   # decoder layer 1  (32  -> 128)
                       w4_ref, b4_ref,   # decoder layer 2  (128 -> 784pad)
                       out_ref):
    x = x_ref[...]                                              # bf16 (TM, 784)

    # ----- encoder -----
    h1 = jnp.dot(x, w1_ref[...], preferred_element_type=jnp.float32) + b1_ref[...]
    h1 = jnp.maximum(h1, 0.0).astype(jnp.bfloat16)              # ReLU in f32, bf16 for MXU
    z = jnp.dot(h1, w2_ref[...], preferred_element_type=jnp.float32) + b2_ref[...]
    z = z.astype(jnp.bfloat16)

    # ----- decoder -----
    h2 = jnp.dot(z, w3_ref[...], preferred_element_type=jnp.float32) + b3_ref[...]
    h2 = jnp.maximum(h2, 0.0).astype(jnp.bfloat16)
    y = jnp.dot(h2, w4_ref[...], preferred_element_type=jnp.float32) + b4_ref[...]

    out_ref[...] = y.astype(out_ref.dtype)                      # lane-dense f32 store


def autoencoder_forward(x, params, *, tm=256):
    """x: (B, 784) float32.  Returns (B, 784) float32 reconstruction."""
    (w1, b1, w2, b2, w3, b3, w4, b4) = params
    B, d_in = x.shape
    d_hid = w1.shape[1]
    d_lat = w2.shape[1]
    d_out = w4.shape[1]

    # --- pad the output feature dim to a multiple of 128 (lane-dense stores) ---
    d_out_p = _round_up(d_out, 128)
    if d_out_p != d_out:
        w4 = jnp.pad(w4, ((0, 0), (0, d_out_p - d_out)))
        b4 = jnp.pad(b4, ((0, 0), (0, d_out_p - d_out)))

    # --- bf16 weights / streamed x, f32 biases (f32 accumulation in-kernel) ---
    x_bf = x.astype(jnp.bfloat16)
    w1, w2, w3, w4 = (w.astype(jnp.bfloat16) for w in (w1, w2, w3, w4))
    b1, b2, b3, b4 = (b.astype(jnp.float32) for b in (b1, b2, b3, b4))

    # --- batch tiling: TM=256 for real batches, shrink for tiny ones ---
    tm = min(tm, _round_up(B, 8))
    b_pad = _round_up(B, tm)
    if b_pad != B:
        x_bf = jnp.pad(x_bf, ((0, b_pad - B), (0, 0)))
    grid = (b_pad // tm,)

    # Weights/biases: constant index_map -> DMA'd once, VMEM-resident.
    def const_spec(shape):
        return pl.BlockSpec(shape, lambda i: (0, 0))

    flops = 2 * b_pad * (d_in * d_hid + d_hid * d_lat + d_lat * d_hid + d_hid * d_out_p)
    bytes_accessed = (
        b_pad * d_in * 2                                        # x (bf16)
        + 2 * (d_in * d_hid + d_hid * d_lat + d_lat * d_hid + d_hid * d_out_p)  # weights
        + 4 * (2 * d_hid + d_lat + d_out_p)                     # biases (f32)
        + b_pad * d_out_p * 4                                   # out (f32)
    )

    out = pl.pallas_call(
        autoencoder_kernel,
        out_shape=jax.ShapeDtypeStruct((b_pad, d_out_p), jnp.float32),
        grid=grid,
        in_specs=[
            pl.BlockSpec((tm, d_in), lambda i: (i, 0)),         # x tile (pipelined)
            const_spec((d_in, d_hid)), const_spec((1, d_hid)),  # w1, b1
            const_spec((d_hid, d_lat)), const_spec((1, d_lat)), # w2, b2
            const_spec((d_lat, d_hid)), const_spec((1, d_hid)), # w3, b3
            const_spec((d_hid, d_out_p)), const_spec((1, d_out_p)),  # w4, b4
        ],
        out_specs=pl.BlockSpec((tm, d_out_p), lambda i: (i, 0)),
        compiler_params=pltpu.CompilerParams(
            dimension_semantics=("parallel",)),
        cost_estimate=pl.CostEstimate(
            flops=flops, transcendentals=0, bytes_accessed=bytes_accessed),
    )(x_bf, w1, b1, w2, b2, w3, b3, w4, b4)

    return out[:B, :d_out]


def init_params(key, d_in=784, d_hidden=128, d_latent=32):
    """Deterministic synthetic parameters (PyTorch-Linear-like scaling)."""
    ks = jax.random.split(key, 8)

    def linear(kw, kb, fan_in, fan_out):
        bound = 1.0 / jnp.sqrt(fan_in)
        w = jax.random.uniform(kw, (fan_in, fan_out), jnp.float32, -bound, bound)
        b = jax.random.uniform(kb, (1, fan_out), jnp.float32, -bound, bound)
        return w, b

    w1, b1 = linear(ks[0], ks[1], d_in, d_hidden)       # encoder L1
    w2, b2 = linear(ks[2], ks[3], d_hidden, d_latent)   # encoder L2
    w3, b3 = linear(ks[4], ks[5], d_latent, d_hidden)   # decoder L1
    w4, b4 = linear(ks[6], ks[7], d_hidden, d_in)       # decoder L2
    return (w1, b1, w2, b2, w3, b3, w4, b4)


def reference_forward(x, params):
    """Pure-JAX reference with the same bf16-input / f32-accumulate recipe."""
    (w1, b1, w2, b2, w3, b3, w4, b4) = params
    bf = jnp.bfloat16
    xb = x.astype(bf)
    h1 = jnp.maximum(
        jnp.dot(xb, w1.astype(bf), preferred_element_type=jnp.float32) + b1, 0.0
    ).astype(bf)
    z = (jnp.dot(h1, w2.astype(bf), preferred_element_type=jnp.float32) + b2).astype(bf)
    h2 = jnp.maximum(
        jnp.dot(z, w3.astype(bf), preferred_element_type=jnp.float32) + b3, 0.0
    ).astype(bf)
    return jnp.dot(h2, w4.astype(bf), preferred_element_type=jnp.float32) + b4


if __name__ == "__main__":
    key = jax.random.PRNGKey(0)
    k_x, k_p = jax.random.split(key)

    B, D_IN, D_HID, D_LAT = 8, 784, 128, 32  # flattened 28x28 MNIST images
    x = jax.random.uniform(k_x, (B, D_IN), jnp.float32)
    params = init_params(k_p, D_IN, D_HID, D_LAT)

    out = autoencoder_forward(x, params)
    out = jax.block_until_ready(out)

    ref = reference_forward(x, params)
    assert out.shape == (B, D_IN), out.shape
    # bf16-input matmuls (f32 accumulation): tolerance reflects bf16 rounding.
    assert jnp.allclose(out, ref, atol=1e-2, rtol=1e-2), (
        float(jnp.max(jnp.abs(out - ref))))

    print("KERNEL_OK")
</pallas_src>

<mosaic_0001>
module attributes {stable_mosaic.version = 11 : i64} {
  func.func @autoencoder_kernel(%arg0: i32, %arg1: memref<8x784xbf16, #tpu.memory_space<vmem>>, %arg2: memref<784x128xbf16, #tpu.memory_space<vmem>>, %arg3: memref<1x128xf32, #tpu.memory_space<vmem>>, %arg4: memref<128x32xbf16, #tpu.memory_space<vmem>>, %arg5: memref<1x32xf32, #tpu.memory_space<vmem>>, %arg6: memref<32x128xbf16, #tpu.memory_space<vmem>>, %arg7: memref<1x128xf32, #tpu.memory_space<vmem>>, %arg8: memref<128x896xbf16, #tpu.memory_space<vmem>>, %arg9: memref<1x896xf32, #tpu.memory_space<vmem>>, %arg10: memref<8x896xf32, #tpu.memory_space<vmem>>) attributes {dimension_semantics = [#tpu.dimension_semantics<parallel>], iteration_bounds = array<i64: 1>, scalar_prefetch = 0 : i64, scratch_operands = 0 : i64, tpu.core_type = #tpu.core_type<tc>, window_params = [{transform_indices = @transform_0, window_bounds = array<i64: 8, 784>}, {pipeline_mode = #tpu.pipeline_mode<synchronous>, transform_indices = @transform_1, window_bounds = array<i64: 784, 128>}, {pipeline_mode = #tpu.pipeline_mode<synchronous>, transform_indices = @transform_2, window_bounds = array<i64: 1, 128>}, {pipeline_mode = #tpu.pipeline_mode<synchronous>, transform_indices = @transform_3, window_bounds = array<i64: 128, 32>}, {pipeline_mode = #tpu.pipeline_mode<synchronous>, transform_indices = @transform_4, window_bounds = array<i64: 1, 32>}, {pipeline_mode = #tpu.pipeline_mode<synchronous>, transform_indices = @transform_5, window_bounds = array<i64: 32, 128>}, {pipeline_mode = #tpu.pipeline_mode<synchronous>, transform_indices = @transform_6, window_bounds = array<i64: 1, 128>}, {pipeline_mode = #tpu.pipeline_mode<synchronous>, transform_indices = @transform_7, window_bounds = array<i64: 128, 896>}, {pipeline_mode = #tpu.pipeline_mode<synchronous>, transform_indices = @transform_8, window_bounds = array<i64: 1, 896>}, {transform_indices = @transform_9, window_bounds = array<i64: 8, 896>}]} {
    %c0 = arith.constant 0 : index
    %c0_0 = arith.constant 0 : index
    %0 = vector.load %arg1[%c0, %c0_0] : memref<8x784xbf16, #tpu.memory_space<vmem>>, vector<8x784xbf16>
    %c0_1 = arith.constant 0 : index
    %c0_2 = arith.constant 0 : index
    %1 = vector.load %arg2[%c0_1, %c0_2] : memref<784x128xbf16, #tpu.memory_space<vmem>>, vector<784x128xbf16>
    %cst = arith.constant dense<0.000000e+00> : vector<8x128xf32>
    %2 = tpu.matmul %0, %1, %cst {dimension_numbers = #tpu.dot_dimension_numbers<[1], [0], [0], [1], [0, 0, 1, 1], [], []>} : vector<8x784xbf16>, vector<784x128xbf16>, vector<8x128xf32> -> vector<8x128xf32>
    %c0_3 = arith.constant 0 : index
    %c0_4 = arith.constant 0 : index
    %3 = vector.load %arg3[%c0_3, %c0_4] : memref<1x128xf32, #tpu.memory_space<vmem>>, vector<1x128xf32>
    %4 = vector.broadcast %3 : vector<1x128xf32> to vector<8x128xf32>
    %5 = arith.addf %2, %4 : vector<8x128xf32>
    %cst_5 = arith.constant 0.000000e+00 : f32
    %6 = vector.broadcast %cst_5 : f32 to vector<8x128xf32>
    %7 = arith.maximumf %5, %6 : vector<8x128xf32>
    %8 = arith.truncf %7 : vector<8x128xf32> to vector<8x128xbf16>
    %c0_6 = arith.constant 0 : index
    %c0_7 = arith.constant 0 : index
    %9 = vector.load %arg4[%c0_6, %c0_7] : memref<128x32xbf16, #tpu.memory_space<vmem>>, vector<128x32xbf16>
    %cst_8 = arith.constant dense<0.000000e+00> : vector<8x32xf32>
    %10 = tpu.matmul %8, %9, %cst_8 {dimension_numbers = #tpu.dot_dimension_numbers<[1], [0], [0], [1], [0, 0, 1, 1], [], []>} : vector<8x128xbf16>, vector<128x32xbf16>, vector<8x32xf32> -> vector<8x32xf32>
    %c0_9 = arith.constant 0 : index
    %c0_10 = arith.constant 0 : index
    %11 = vector.load %arg5[%c0_9, %c0_10] : memref<1x32xf32, #tpu.memory_space<vmem>>, vector<1x32xf32>
    %12 = vector.broadcast %11 : vector<1x32xf32> to vector<8x32xf32>
    %13 = arith.addf %10, %12 : vector<8x32xf32>
    %14 = arith.truncf %13 : vector<8x32xf32> to vector<8x32xbf16>
    %c0_11 = arith.constant 0 : index
    %c0_12 = arith.constant 0 : index
    %15 = vector.load %arg6[%c0_11, %c0_12] : memref<32x128xbf16, #tpu.memory_space<vmem>>, vector<32x128xbf16>
    %cst_13 = arith.constant dense<0.000000e+00> : vector<8x128xf32>
    %16 = tpu.matmul %14, %15, %cst_13 {dimension_numbers = #tpu.dot_dimension_numbers<[1], [0], [0], [1], [0, 0, 1, 1], [], []>} : vector<8x32xbf16>, vector<32x128xbf16>, vector<8x128xf32> -> vector<8x128xf32>
    %c0_14 = arith.constant 0 : index
    %c0_15 = arith.constant 0 : index
    %17 = vector.load %arg7[%c0_14, %c0_15] : memref<1x128xf32, #tpu.memory_space<vmem>>, vector<1x128xf32>
    %18 = vector.broadcast %17 : vector<1x128xf32> to vector<8x128xf32>
    %19 = arith.addf %16, %18 : vector<8x128xf32>
    %cst_16 = arith.constant 0.000000e+00 : f32
    %20 = vector.broadcast %cst_16 : f32 to vector<8x128xf32>
    %21 = arith.maximumf %19, %20 : vector<8x128xf32>
    %22 = arith.truncf %21 : vector<8x128xf32> to vector<8x128xbf16>
    %c0_17 = arith.constant 0 : index
    %c0_18 = arith.constant 0 : index
    %23 = vector.load %arg8[%c0_17, %c0_18] : memref<128x896xbf16, #tpu.memory_space<vmem>>, vector<128x896xbf16>
    %cst_19 = arith.constant dense<0.000000e+00> : vector<8x896xf32>
    %24 = tpu.matmul %22, %23, %cst_19 {dimension_numbers = #tpu.dot_dimension_numbers<[1], [0], [0], [1], [0, 0, 1, 1], [], []>} : vector<8x128xbf16>, vector<128x896xbf16>, vector<8x896xf32> -> vector<8x896xf32>
    %c0_20 = arith.constant 0 : index
    %c0_21 = arith.constant 0 : index
    %25 = vector.load %arg9[%c0_20, %c0_21] : memref<1x896xf32, #tpu.memory_space<vmem>>, vector<1x896xf32>
    %26 = vector.broadcast %25 : vector<1x896xf32> to vector<8x896xf32>
    %27 = arith.addf %24, %26 : vector<8x896xf32>
    %c0_22 = arith.constant 0 : index
    %c0_23 = arith.constant 0 : index
    %28 = vector.load %arg10[%c0_22, %c0_23] : memref<8x896xf32, #tpu.memory_space<vmem>>, vector<8x896xf32>
    tpu.vector_store %arg10[%c0_22, %c0_23], %27 {strides = array<i32>} : memref<8x896xf32, #tpu.memory_space<vmem>>, vector<8x896xf32>,
    return
  }
  func.func @transform_0(%arg0: i32) -> (i32, i32) {
    %c0_i32 = arith.constant 0 : i32
    %c0_i32_0 = arith.constant 0 : i32
    return %arg0, %c0_i32 : i32, i32
  }
  func.func @transform_1(%arg0: i32) -> (i32, i32) {
    %c0_i32 = arith.constant 0 : i32
    %c0_i32_0 = arith.constant 0 : i32
    %c0_i32_1 = arith.constant 0 : i32
    return %c0_i32, %c0_i32_0 : i32, i32
  }
  func.func @transform_2(%arg0: i32) -> (i32, i32) {
    %c0_i32 = arith.constant 0 : i32
    %c0_i32_0 = arith.constant 0 : i32
    %c0_i32_1 = arith.constant 0 : i32
    return %c0_i32, %c0_i32_0 : i32, i32
  }
  func.func @transform_3(%arg0: i32) -> (i32, i32) {
    %c0_i32 = arith.constant 0 : i32
    %c0_i32_0 = arith.constant 0 : i32
    %c0_i32_1 = arith.constant 0 : i32
    return %c0_i32, %c0_i32_0 : i32, i32
  }
  func.func @transform_4(%arg0: i32) -> (i32, i32) {
    %c0_i32 = arith.constant 0 : i32
    %c0_i32_0 = arith.constant 0 : i32
    %c0_i32_1 = arith.constant 0 : i32
    return %c0_i32, %c0_i32_0 : i32, i32
  }
  func.func @transform_5(%arg0: i32) -> (i32, i32) {
    %c0_i32 = arith.constant 0 : i32
    %c0_i32_0 = arith.constant 0 : i32
    %c0_i32_1 = arith.constant 0 : i32
    return %c0_i32, %c0_i32_0 : i32, i32
  }
  func.func @transform_6(%arg0: i32) -> (i32, i32) {
    %c0_i32 = arith.constant 0 : i32
    %c0_i32_0 = arith.constant 0 : i32
    %c0_i32_1 = arith.constant 0 : i32
    return %c0_i32, %c0_i32_0 : i32, i32
  }
  func.func @transform_7(%arg0: i32) -> (i32, i32) {
    %c0_i32 = arith.constant 0 : i32
    %c0_i32_0 = arith.constant 0 : i32
    %c0_i32_1 = arith.constant 0 : i32
    return %c0_i32, %c0_i32_0 : i32, i32
  }
  func.func @transform_8(%arg0: i32) -> (i32, i32) {
    %c0_i32 = arith.constant 0 : i32
    %c0_i32_0 = arith.constant 0 : i32
    %c0_i32_1 = arith.constant 0 : i32
    return %c0_i32, %c0_i32_0 : i32, i32
  }
  func.func @transform_9(%arg0: i32) -> (i32, i32) {
    %c0_i32 = arith.constant 0 : i32
    %c0_i32_0 = arith.constant 0 : i32
    return %arg0, %c0_i32 : i32, i32
  }
}

</mosaic_0001>

<llo_original>
// kernel: tpu_custom_call.1
$region0: #{tpu_custom_call.1}
  #allocation0 [shape = 'u32[]', space=smem, size = 0x4, offset = 0x4, fixed_abs, tag = 'smem constant byte address 0x4 - core index']
  #allocation1 [shape = 'u32[72,128]{1,0:T(1,128)}', space=vmem, size = 0x9000, scoped, tag = 'internal scratch']
  %s0 = inlined_call_operand.vmem [shape: bf16[8,784], index: 0, kind: input, shape index: {}]
  %s1 = inlined_call_operand.hbm [shape: bf16[784,128], index: 1, kind: input, shape index: {}]
  %s2 = inlined_call_operand.vmem [shape: f32[1,128], index: 2, kind: input, shape index: {}]
  %s3 = inlined_call_operand.vmem [shape: bf16[128,32], index: 3, kind: input, shape index: {}]
  %s4 = inlined_call_operand.vmem [shape: f32[1,32], index: 4, kind: input, shape index: {}]
  %s5 = inlined_call_operand.vmem [shape: bf16[32,128], index: 5, kind: input, shape index: {}]
  %s6 = inlined_call_operand.vmem [shape: f32[1,128], index: 6, kind: input, shape index: {}]
  %s7 = inlined_call_operand.hbm [shape: bf16[128,896], index: 7, kind: input, shape index: {}]
  %s8 = inlined_call_operand.vmem [shape: f32[1,896], index: 8, kind: input, shape index: {}]
  %s9 = inlined_call_operand.hbm [shape: f32[8,896], index: 9, kind: output, shape index: {}]
  %s10 = sld [smem:[#allocation0]]
  $region54: #{tpu_custom_call.1} parent=0
    _
  %s12 = ssub.s32 1, %s10
  %s13 = scalar_select 0, %s12, %s10
  $region1: #{tpu_custom_call.1} parent=0
    #allocation2 [shape = 'u8[200704]{0}', space=vmem, size = 0x31000, scoped, tag = 'input window, operand 1, single buffered']
    #allocation3 [shape = 's32[1]{0}', space=sflag, size = 0x4, scoped, tag = 'scoped memory for tpu_custom_call.1']
    #allocation4 [shape = 's32[1]{0}', space=sflag, size = 0x4, scoped, tag = 'scoped memory for tpu_custom_call.1']
    #allocation5 [shape = 'u8[229376]{0}', space=vmem, size = 0x38000, scoped, tag = 'input window, operand 7, single buffered']
    #allocation6 [shape = 's32[1]{0}', space=sflag, size = 0x4, scoped, tag = 'scoped memory for tpu_custom_call.1']
    #allocation7 [shape = 'u8[28672]{0}', space=vmem, size = 0x7000, scoped, tag = 'output window, operand 0, single buffered']
    %14 = vsyncpa [#allocation3], 0
    %15 = vsyncpa [#allocation6], 0
    %16 = vsyncpa [#allocation4], 0
    // Predicated region
    $region2: #{tpu_custom_call.1} parent=1 // pred_check
      _
    $region3: #{tpu_custom_call.1} parent=1 // pred_check_branch
      %18 = sbr.rel (0) target = $region5
    $region4: #{tpu_custom_call.1} parent=1 // pred_region
      _
    $region5: #{tpu_custom_call.1} parent=1 // pred_fallthru
      _
    // Predicated region
    $region6: #{tpu_custom_call.1} parent=1 // pred_check
      _
    $region7: #{tpu_custom_call.1} parent=1 // pred_check_branch
      %20 = sbr.rel (0) target = $region9
    $region8: #{tpu_custom_call.1} parent=1 // pred_region
      %22 = vsyncadd [#allocation3], 0
      %s23 = sshll.u32 %s1, 4
      %s24 = int_to_ptr.hbm [resolvable:$true] %s23
      %s25 = sshll.u32 [#allocation2], 4
      %s26 = int_to_ptr.vmem [resolvable:$true] %s25
      %31 = dma.hbm_to_vmem [thread:$0]  %s24, 6272, %s26, [#allocation3], 64, 64, 4
    $region9: #{tpu_custom_call.1} parent=1 // pred_fallthru
      _
    // Predicated region
    $region10: #{tpu_custom_call.1} parent=1 // pred_check
      _
    $region11: #{tpu_custom_call.1} parent=1 // pred_check_branch
      %33 = sbr.rel (0) target = $region13
    $region12: #{tpu_custom_call.1} parent=1 // pred_region
      _
    $region13: #{tpu_custom_call.1} parent=1 // pred_fallthru
      _
    // Predicated region
    $region14: #{tpu_custom_call.1} parent=1 // pred_check
      _
    $region15: #{tpu_custom_call.1} parent=1 // pred_check_branch
      %35 = sbr.rel (0) target = $region17
    $region16: #{tpu_custom_call.1} parent=1 // pred_region
      _
    $region17: #{tpu_custom_call.1} parent=1 // pred_fallthru
      _
    // Predicated region
    $region18: #{tpu_custom_call.1} parent=1 // pred_check
      _
    $region19: #{tpu_custom_call.1} parent=1 // pred_check_branch
      %37 = sbr.rel (0) target = $region21
    $region20: #{tpu_custom_call.1} parent=1 // pred_region
      _
    $region21: #{tpu_custom_call.1} parent=1 // pred_fallthru
      _
    // Predicated region
    $region22: #{tpu_custom_call.1} parent=1 // pred_check
      _
    $region23: #{tpu_custom_call.1} parent=1 // pred_check_branch
      %39 = sbr.rel (0) target = $region25
    $region24: #{tpu_custom_call.1} parent=1 // pred_region
      _
    $region25: #{tpu_custom_call.1} parent=1 // pred_fallthru
      _
    // Predicated region
    $region26: #{tpu_custom_call.1} parent=1 // pred_check
      _
    $region27: #{tpu_custom_call.1} parent=1 // pred_check_branch
      %41 = sbr.rel (0) target = $region29
    $region28: #{tpu_custom_call.1} parent=1 // pred_region
      _
    $region29: #{tpu_custom_call.1} parent=1 // pred_fallthru
      _
    // Predicated region
    $region30: #{tpu_custom_call.1} parent=1 // pred_check
      _
    $region31: #{tpu_custom_call.1} parent=1 // pred_check_branch
      %43 = sbr.rel (0) target = $region33
    $region32: #{tpu_custom_call.1} parent=1 // pred_region
      %45 = vsyncadd [#allocation6], 0
      %s46 = sshll.u32 %s7, 4
      %s47 = int_to_ptr.hbm [resolvable:$true] %s46
      %s48 = sshll.u32 [#allocation5], 4
      %s49 = int_to_ptr.vmem [resolvable:$true] %s48
      %54 = dma.hbm_to_vmem [thread:$0]  %s47, 7168, %s49, [#allocation6], 448, 448, 28
    $region33: #{tpu_custom_call.1} parent=1 // pred_fallthru
      _
    // Predicated region
    $region34: #{tpu_custom_call.1} parent=1 // pred_check
      _
    $region35: #{tpu_custom_call.1} parent=1 // pred_check_branch
      %56 = sbr.rel (0) target = $region37
    $region36: #{tpu_custom_call.1} parent=1 // pred_region
      _
    $region37: #{tpu_custom_call.1} parent=1 // pred_fallthru
      _
    // Predicated region
    $region38: #{tpu_custom_call.1} parent=1 // pred_check
      _
    $region39: #{tpu_custom_call.1} parent=1 // pred_check_branch
      %58 = sbr.rel (0) target = $region41
    $region40: #{tpu_custom_call.1} parent=1 // pred_region
      %60 = dma.done [#allocation3], 6272
    $region41: #{tpu_custom_call.1} parent=1 // pred_fallthru
      _
    // Predicated region
    $region42: #{tpu_custom_call.1} parent=1 // pred_check
      _
    $region43: #{tpu_custom_call.1} parent=1 // pred_check_branch
      %62 = sbr.rel (0) target = $region45
    $region44: #{tpu_custom_call.1} parent=1 // pred_region
      %64 = dma.done [#allocation6], 7168
    $region45: #{tpu_custom_call.1} parent=1 // pred_fallthru
      _
    %v66 = vld [vmem:[%s0] sm:$0xff]
    %v67 = vld [vmem:[%s0 + $0x8] sm:$0xff]
    %v68 = vld [vmem:[%s0 + $0x10] sm:$0xff]
    %v69 = vld [vmem:[%s0 + $0x18] sm:$0xf]
    %v70 = vld [vmem:[#allocation2] sm:$0xf]
    %v71 = vld [vmem:[#allocation2 + $0x4] sm:$0xf]
    %v72 = vld [vmem:[#allocation2 + $0x8] sm:$0xf]
    %v73 = vld [vmem:[#allocation2 + $0xc] sm:$0xf]
    %v74 = vld [vmem:[#allocation2 + $0x10] sm:$0xf]
    %v75 = vld [vmem:[#allocation2 + $0x14] sm:$0xf]
    %v76 = vld [vmem:[#allocation2 + $0x18] sm:$0xf]
    %v77 = vld [vmem:[#allocation2 + $0x1c] sm:$0xf]
    %v78 = vld [vmem:[#allocation2 + $0x20] sm:$0xf]
    %v79 = vld [vmem:[#allocation2 + $0x24] sm:$0xf]
    %v80 = vld [vmem:[#allocation2 + $0x28] sm:$0xf]
    %v81 = vld [vmem:[#allocation2 + $0x2c] sm:$0xf]
    %v82 = vld [vmem:[#allocation2 + $0x30] sm:$0xf]
    %v83 = vld [vmem:[#allocation2 + $0x34] sm:$0xf]
    %v84 = vld [vmem:[#allocation2 + $0x38] sm:$0xf]
    %v85 = vld [vmem:[#allocation2 + $0x3c] sm:$0xf]
    %v86 = vld [vmem:[#allocation2 + $0x40] sm:$0xf]
    %v87 = vld [vmem:[#allocation2 + $0x44] sm:$0xf]
    %v88 = vld [vmem:[#allocation2 + $0x48] sm:$0xf]
    %v89 = vld [vmem:[#allocation2 + $0x4c] sm:$0xf]
    %v90 = vld [vmem:[#allocation2 + $0x50] sm:$0xf]
    %v91 = vld [vmem:[#allocation2 + $0x54] sm:$0xf]
    %v92 = vld [vmem:[#allocation2 + $0x58] sm:$0xf]
    %v93 = vld [vmem:[#allocation2 + $0x5c] sm:$0xf]
    %v94 = vld [vmem:[#allocation2 + $0x60] sm:$0xf]
    %v95 = vld [vmem:[#allocation2 + $0x64] sm:$0xf]
    %v96 = vld [vmem:[#allocation2 + $0x68] sm:$0xf]
    %v97 = vld [vmem:[#allocation2 + $0x6c] sm:$0xf]
    %v98 = vld [vmem:[#allocation2 + $0x70] sm:$0xf]
    %v99 = vld [vmem:[#allocation2 + $0x74] sm:$0xf]
    %v100 = vld [vmem:[#allocation2 + $0x78] sm:$0xf]
    %v101 = vld [vmem:[#allocation2 + $0x7c] sm:$0xf]
    %v102 = vld [vmem:[#allocation2 + $0x80] sm:$0xf]
    %v103 = vld [vmem:[#allocation2 + $0x84] sm:$0xf]
    %v104 = vld [vmem:[#allocation2 + $0x88] sm:$0xf]
    %v105 = vld [vmem:[#allocation2 + $0x8c] sm:$0xf]
    %v106 = vld [vmem:[#allocation2 + $0x90] sm:$0xf]
    %v107 = vld [vmem:[#allocation2 + $0x94] sm:$0xf]
    %v108 = vld [vmem:[#allocation2 + $0x98] sm:$0xf]
    %v109 = vld [vmem:[#allocation2 + $0x9c] sm:$0xf]
    %v110 = vld [vmem:[#allocation2 + $0xa0] sm:$0xf]
    %v111 = vld [vmem:[#allocation2 + $0xa4] sm:$0xf]
    %v112 = vld [vmem:[#allocation2 + $0xa8] sm:$0xf]
    %v113 = vld [vmem:[#allocation2 + $0xac] sm:$0xf]
    %v114 = vld [vmem:[#allocation2 + $0xb0] sm:$0xf]
    %v115 = vld [vmem:[#allocation2 + $0xb4] sm:$0xf]
    %v116 = vld [vmem:[#allocation2 + $0xb8] sm:$0xf]
    %v117 = vld [vmem:[#allocation2 + $0xbc] sm:$0xf]
    %v118 = vld [vmem:[#allocation2 + $0xc0] sm:$0xf]
    %v119 = vld [vmem:[#allocation2 + $0xc4] sm:$0xf]
    %v120 = vld [vmem:[#allocation2 + $0xc8] sm:$0xf]
    %v121 = vld [vmem:[#allocation2 + $0xcc] sm:$0xf]
    %v122 = vld [vmem:[#allocation2 + $0xd0] sm:$0xf]
    %v123 = vld [vmem:[#allocation2 + $0xd4] sm:$0xf]
    %v124 = vld [vmem:[#allocation2 + $0xd8] sm:$0xf]
    %v125 = vld [vmem:[#allocation2 + $0xdc] sm:$0xf]
    %v126 = vld [vmem:[#allocation2 + $0xe0] sm:$0xf]
    %v127 = vld [vmem:[#allocation2 + $0xe4] sm:$0xf]
    %v128 = vld [vmem:[#allocation2 + $0xe8] sm:$0xf]
    %v129 = vld [vmem:[#allocation2 + $0xec] sm:$0xf]
    %v130 = vld [vmem:[#allocation2 + $0xf0] sm:$0xf]
    %v131 = vld [vmem:[#allocation2 + $0xf4] sm:$0xf]
    %v132 = vld [vmem:[#allocation2 + $0xf8] sm:$0xf]
    %v133 = vld [vmem:[#allocation2 + $0xfc] sm:$0xf]
    %v134 = vld [vmem:[#allocation2 + $0x100] sm:$0xf]
    %v135 = vld [vmem:[#allocation2 + $0x104] sm:$0xf]
    %v136 = vld [vmem:[#allocation2 + $0x108] sm:$0xf]
    %v137 = vld [vmem:[#allocation2 + $0x10c] sm:$0xf]
    %v138 = vld [vmem:[#allocation2 + $0x110] sm:$0xf]
    %v139 = vld [vmem:[#allocation2 + $0x114] sm:$0xf]
    %v140 = vld [vmem:[#allocation2 + $0x118] sm:$0xf]
    %v141 = vld [vmem:[#allocation2 + $0x11c] sm:$0xf]
    %v142 = vld [vmem:[#allocation2 + $0x120] sm:$0xf]
    %v143 = vld [vmem:[#allocation2 + $0x124] sm:$0xf]
    %v144 = vld [vmem:[#allocation2 + $0x128] sm:$0xf]
    %v145 = vld [vmem:[#allocation2 + $0x12c] sm:$0xf]
    %v146 = vld [vmem:[#allocation2 + $0x130] sm:$0xf]
    %v147 = vld [vmem:[#allocation2 + $0x134] sm:$0xf]
    %v148 = vld [vmem:[#allocation2 + $0x138] sm:$0xf]
    %v149 = vld [vmem:[#allocation2 + $0x13c] sm:$0xf]
    %v150 = vld [vmem:[#allocation2 + $0x140] sm:$0xf]
    %v151 = vld [vmem:[#allocation2 + $0x144] sm:$0xf]
    %v152 = vld [vmem:[#allocation2 + $0x148] sm:$0xf]
    %v153 = vld [vmem:[#allocation2 + $0x14c] sm:$0xf]
    %v154 = vld [vmem:[#allocation2 + $0x150] sm:$0xf]
    %v155 = vld [vmem:[#allocation2 + $0x154] sm:$0xf]
    %v156 = vld [vmem:[#allocation2 + $0x158] sm:$0xf]
    %v157 = vld [vmem:[#allocation2 + $0x15c] sm:$0xf]
    %v158 = vld [vmem:[#allocation2 + $0x160] sm:$0xf]
    %v159 = vld [vmem:[#allocation2 + $0x164] sm:$0xf]
    %v160 = vld [vmem:[#allocation2 + $0x168] sm:$0xf]
    %v161 = vld [vmem:[#allocation2 + $0x16c] sm:$0xf]
    %v162 = vld [vmem:[#allocation2 + $0x170] sm:$0xf]
    %v163 = vld [vmem:[#allocation2 + $0x174] sm:$0xf]
    %v164 = vld [vmem:[#allocation2 + $0x178] sm:$0xf]
    %v165 = vld [vmem:[#allocation2 + $0x17c] sm:$0xf]
    %v166 = vld [vmem:[#allocation2 + $0x180] sm:$0xf]
    %v167 = vld [vmem:[#allocation2 + $0x184] sm:$0xf]
    %v168 = vld [vmem:[%s2] sm:$0x1]
    %v170 = vperm.slane %v168, 0
    %v176 = vunpack.c.l.b16 %v66
    %v177 = vunpack.c.h.b16 %v66
    %v178 = vunpack.c.l.b16 %v67
    %v179 = vunpack.c.h.b16 %v67
    %v180 = vunpack.c.l.b16 %v68
    %v181 = vunpack.c.h.b16 %v68
    %v182 = vunpack.c.l.b16 %v69
    %v183 = vpack.c.b16 %v176, %v176
    %v184 = vpack.c.b16 %v177, %v177
    %v185 = vpack.c.b16 %v178, %v178
    %v186 = vpack.c.b16 %v179, %v179
    %v187 = vpack.c.b16 %v180, %v180
    %v188 = vpack.c.b16 %v181, %v181
    %v189 = vpack.c.b16 %v182, %v182
    %v294 = vunpack.c.l.b16 %v70
    %v295 = vunpack.c.l.b16 %v71
    %v296 = vunpack.c.l.b16 %v72
    %v297 = vunpack.c.l.b16 %v73
    %v298 = vunpack.c.l.b16 %v74
    %v299 = vunpack.c.l.b16 %v75
    %v300 = vunpack.c.l.b16 %v76
    %v301 = vunpack.c.l.b16 %v77
    %v302 = vunpack.c.l.b16 %v78
    %v303 = vunpack.c.l.b16 %v79
    %v304 = vunpack.c.l.b16 %v80
    %v305 = vunpack.c.l.b16 %v81
    %v306 = vunpack.c.l.b16 %v82
    %v307 = vunpack.c.l.b16 %v83
    %v308 = vunpack.c.l.b16 %v84
    %v309 = vunpack.c.l.b16 %v85
    %v310 = vunpack.c.l.b16 %v86
    %v311 = vunpack.c.l.b16 %v87
    %v312 = vunpack.c.l.b16 %v88
    %v313 = vunpack.c.l.b16 %v89
    %v314 = vunpack.c.l.b16 %v90
    %v315 = vunpack.c.l.b16 %v91
    %v316 = vunpack.c.l.b16 %v92
    %v317 = vunpack.c.l.b16 %v93
    %v318 = vunpack.c.l.b16 %v94
    %v319 = vunpack.c.l.b16 %v95
    %v320 = vunpack.c.l.b16 %v96
    %v321 = vunpack.c.l.b16 %v97
    %v322 = vunpack.c.l.b16 %v98
    %v323 = vunpack.c.l.b16 %v99
    %v324 = vunpack.c.l.b16 %v100
    %v325 = vunpack.c.l.b16 %v101
    %v326 = vunpack.c.l.b16 %v102
    %v327 = vunpack.c.l.b16 %v103
    %v328 = vunpack.c.l.b16 %v104
    %v329 = vunpack.c.l.b16 %v105
    %v330 = vunpack.c.l.b16 %v106
    %v331 = vunpack.c.l.b16 %v107
    %v332 = vunpack.c.l.b16 %v108
    %v333 = vunpack.c.l.b16 %v109
    %v334 = vunpack.c.l.b16 %v110
    %v335 = vunpack.c.l.b16 %v111
    %v336 = vunpack.c.l.b16 %v112
    %v337 = vunpack.c.l.b16 %v113
    %v338 = vunpack.c.l.b16 %v114
    %v339 = vunpack.c.l.b16 %v115
    %v340 = vunpack.c.l.b16 %v116
    %v341 = vunpack.c.l.b16 %v117
    %v342 = vunpack.c.l.b16 %v118
    %v343 = vunpack.c.l.b16 %v119
    %v344 = vunpack.c.l.b16 %v120
    %v345 = vunpack.c.l.b16 %v121
    %v346 = vunpack.c.l.b16 %v122
    %v347 = vunpack.c.l.b16 %v123
    %v348 = vunpack.c.l.b16 %v124
    %v349 = vunpack.c.l.b16 %v125
    %v350 = vunpack.c.l.b16 %v126
    %v351 = vunpack.c.l.b16 %v127
    %v352 = vunpack.c.l.b16 %v128
    %v353 = vunpack.c.l.b16 %v129
    %v354 = vunpack.c.l.b16 %v130
    %v355 = vunpack.c.l.b16 %v131
    %v356 = vunpack.c.l.b16 %v132
    %v357 = vunpack.c.l.b16 %v133
    %v358 = vunpack.c.l.b16 %v134
    %v359 = vunpack.c.l.b16 %v135
    %v360 = vunpack.c.l.b16 %v136
    %v361 = vunpack.c.l.b16 %v137
    %v362 = vunpack.c.l.b16 %v138
    %v363 = vunpack.c.l.b16 %v139
    %v364 = vunpack.c.l.b16 %v140
    %v365 = vunpack.c.l.b16 %v141
    %v366 = vunpack.c.l.b16 %v142
    %v367 = vunpack.c.l.b16 %v143
    %v368 = vunpack.c.l.b16 %v144
    %v369 = vunpack.c.l.b16 %v145
    %v370 = vunpack.c.l.b16 %v146
    %v371 = vunpack.c.l.b16 %v147
    %v372 = vunpack.c.l.b16 %v148
    %v373 = vunpack.c.l.b16 %v149
    %v374 = vunpack.c.l.b16 %v150
    %v375 = vunpack.c.l.b16 %v151
    %v376 = vunpack.c.l.b16 %v152
    %v377 = vunpack.c.l.b16 %v153
    %v378 = vunpack.c.l.b16 %v154
    %v379 = vunpack.c.l.b16 %v155
    %v380 = vunpack.c.l.b16 %v156
    %v381 = vunpack.c.l.b16 %v157
    %v382 = vunpack.c.l.b16 %v158
    %v383 = vunpack.c.l.b16 %v159
    %v384 = vunpack.c.l.b16 %v160
    %v385 = vunpack.c.l.b16 %v161
    %v386 = vunpack.c.l.b16 %v162
    %v387 = vunpack.c.l.b16 %v163
    %v388 = vunpack.c.l.b16 %v164
    %v389 = vunpack.c.l.b16 %v165
    %v390 = vunpack.c.l.b16 %v166
    %v391 = vunpack.c.l.b16 %v167
    %v392 = vpack.c.b16 %v295, %v294
    %v393 = vpack.c.b16 %v297, %v296
    %v394 = vpack.c.b16 %v299, %v298
    %v395 = vpack.c.b16 %v301, %v300
    %v396 = vpack.c.b16 %v303, %v302
    %v397 = vpack.c.b16 %v305, %v304
    %v398 = vpack.c.b16 %v307, %v306
    %v399 = vpack.c.b16 %v309, %v308
    %v400 = vpack.c.b16 %v311, %v310
    %v401 = vpack.c.b16 %v313, %v312
    %v402 = vpack.c.b16 %v315, %v314
    %v403 = vpack.c.b16 %v317, %v316
    %v404 = vpack.c.b16 %v319, %v318
    %v405 = vpack.c.b16 %v321, %v320
    %v406 = vpack.c.b16 %v323, %v322
    %v407 = vpack.c.b16 %v325, %v324
    %v408 = vpack.c.b16 %v327, %v326
    %v409 = vpack.c.b16 %v329, %v328
    %v410 = vpack.c.b16 %v331, %v330
    %v411 = vpack.c.b16 %v333, %v332
    %v412 = vpack.c.b16 %v335, %v334
    %v413 = vpack.c.b16 %v337, %v336
    %v414 = vpack.c.b16 %v339, %v338
    %v415 = vpack.c.b16 %v341, %v340
    %v416 = vpack.c.b16 %v343, %v342
    %v417 = vpack.c.b16 %v345, %v344
    %v418 = vpack.c.b16 %v347, %v346
    %v419 = vpack.c.b16 %v349, %v348
    %v420 = vpack.c.b16 %v351, %v350
    %v421 = vpack.c.b16 %v353, %v352
    %v422 = vpack.c.b16 %v355, %v354
    %v423 = vpack.c.b16 %v357, %v356
    %v424 = vpack.c.b16 %v359, %v358
    %v425 = vpack.c.b16 %v361, %v360
    %v426 = vpack.c.b16 %v363, %v362
    %v427 = vpack.c.b16 %v365, %v364
    %v428 = vpack.c.b16 %v367, %v366
    %v429 = vpack.c.b16 %v369, %v368
    %v430 = vpack.c.b16 %v371, %v370
    %v431 = vpack.c.b16 %v373, %v372
    %v432 = vpack.c.b16 %v375, %v374
    %v433 = vpack.c.b16 %v377, %v376
    %v434 = vpack.c.b16 %v379, %v378
    %v435 = vpack.c.b16 %v381, %v380
    %v436 = vpack.c.b16 %v383, %v382
    %v437 = vpack.c.b16 %v385, %v384
    %v438 = vpack.c.b16 %v387, %v386
    %v439 = vpack.c.b16 %v389, %v388
    %v440 = vpack.c.b16 %v391, %v390
    %vm490 = vcmask 130048
    %v492 = vsel %vm490, %v189, 0
    %494 = vmatpush.bf16.msra.mxu0 %v399
    %495 = vmatpush.bf16.msra.mxu0 %v398
    %496 = vmatpush.bf16.msra.mxu0 %v397
    %497 = vmatpush.bf16.msra.mxu0 %v396
    %498 = vmatpush.bf16.msra.mxu0 %v395
    %499 = vmatpush.bf16.msra.mxu0 %v394
    %500 = vmatpush.bf16.msra.mxu0 %v393
    %501 = vmatpush.bf16.msra.mxu0 %v392
    %502 = vmatmul.bf16.gmra.mxu0 %v183
    %v503 = vpop.f32.mrf.mxu0
    %v504 = vadd.f32 %v170, %v503
    %v505 = vpop.f32.mrf.mxu0
    %506 = vdwg.mxu0
    %507 = vmatpush.bf16.msra.mxu0 %v407
    %508 = vmatpush.bf16.msra.mxu0 %v406
    %509 = vmatpush.bf16.msra.mxu0 %v405
    %510 = vmatpush.bf16.msra.mxu0 %v404
    %511 = vmatpush.bf16.msra.mxu0 %v403
    %512 = vmatpush.bf16.msra.mxu0 %v402
    %513 = vmatpush.bf16.msra.mxu0 %v401
    %514 = vmatpush.bf16.msra.mxu0 %v400
    %515 = vmatmul.bf16.gmra.mxu0 %v184
    %v516 = vpop.f32.mrf.mxu0
    %v517 = vadd.f32 %v504, %v516
    %v518 = vpop.f32.mrf.mxu0
    %519 = vdwg.mxu0
    %520 = vmatpush.bf16.msra.mxu0 %v415
    %521 = vmatpush.bf16.msra.mxu0 %v414
    %522 = vmatpush.bf16.msra.mxu0 %v413
    %523 = vmatpush.bf16.msra.mxu0 %v412
    %524 = vmatpush.bf16.msra.mxu0 %v411
    %525 = vmatpush.bf16.msra.mxu0 %v410
    %526 = vmatpush.bf16.msra.mxu0 %v409
    %527 = vmatpush.bf16.msra.mxu0 %v408
    %528 = vmatmul.bf16.gmra.mxu0 %v185
    %v529 = vpop.f32.mrf.mxu0
    %v530 = vadd.f32 %v517, %v529
    %v531 = vpop.f32.mrf.mxu0
    %532 = vdwg.mxu0
    %533 = vmatpush.bf16.msra.mxu0 %v423
    %534 = vmatpush.bf16.msra.mxu0 %v422
    %535 = vmatpush.bf16.msra.mxu0 %v421
    %536 = vmatpush.bf16.msra.mxu0 %v420
    %537 = vmatpush.bf16.msra.mxu0 %v419
    %538 = vmatpush.bf16.msra.mxu0 %v418
    %539 = vmatpush.bf16.msra.mxu0 %v417
    %540 = vmatpush.bf16.msra.mxu0 %v416
    %541 = vmatmul.bf16.gmra.mxu0 %v186
    %v542 = vpop.f32.mrf.mxu0
    %v543 = vadd.f32 %v530, %v542
    %v544 = vpop.f32.mrf.mxu0
    %545 = vdwg.mxu0
    %546 = vmatpush.bf16.msra.mxu0 %v431
    %547 = vmatpush.bf16.msra.mxu0 %v430
    %548 = vmatpush.bf16.msra.mxu0 %v429
    %549 = vmatpush.bf16.msra.mxu0 %v428
    %550 = vmatpush.bf16.msra.mxu0 %v427
    %551 = vmatpush.bf16.msra.mxu0 %v426
    %552 = vmatpush.bf16.msra.mxu0 %v425
    %553 = vmatpush.bf16.msra.mxu0 %v424
    %554 = vmatmul.bf16.gmra.mxu0 %v187
    %v555 = vpop.f32.mrf.mxu0
    %v556 = vadd.f32 %v543, %v555
    %v557 = vpop.f32.mrf.mxu0
    %558 = vdwg.mxu0
    %559 = vmatpush.bf16.msra.mxu0 %v439
    %560 = vmatpush.bf16.msra.mxu0 %v438
    %561 = vmatpush.bf16.msra.mxu0 %v437
    %562 = vmatpush.bf16.msra.mxu0 %v436
    %563 = vmatpush.bf16.msra.mxu0 %v435
    %564 = vmatpush.bf16.msra.mxu0 %v434
    %565 = vmatpush.bf16.msra.mxu0 %v433
    %566 = vmatpush.bf16.msra.mxu0 %v432
    %567 = vmatmul.bf16.gmra.mxu0 %v188
    %v568 = vpop.f32.mrf.mxu0
    %v569 = vadd.f32 %v556, %v568
    %v570 = vpop.f32.mrf.mxu0
    %571 = vdwg.mxu0
    %572 = vmatpush.bf16.msra.mxu0 0
    %573 = vmatpush.bf16.msra.mxu0 0
    %574 = vmatpush.bf16.msra.mxu0 0
    %575 = vmatpush.bf16.msra.mxu0 0
    %576 = vmatpush.bf16.msra.mxu0 0
    %577 = vmatpush.bf16.msra.mxu0 0
    %578 = vmatpush.bf16.msra.mxu0 0
    %579 = vmatpush.bf16.msra.mxu0 %v440
    %580 = vmatmul.bf16.gmra.mxu0 %v492
    %v581 = vpop.f32.mrf.mxu0
    %v582 = vadd.f32 %v569, %v581
    %v583 = vpop.f32.mrf.mxu0
    %584 = vdwg.mxu0
    %v585 = vmax.f32 %v582, 0.0
    %v586 = vpack.c.bf16 %v585, %v585
    %v587 = vld [vmem:[%s3] sm:$0xf]
    %v588 = vld [vmem:[%s3 + $0x4] sm:$0xf]
    %v589 = vld [vmem:[%s3 + $0x8] sm:$0xf]
    %v590 = vld [vmem:[%s3 + $0xc] sm:$0xf]
    %v591 = vld [vmem:[%s3 + $0x10] sm:$0xf]
    %v592 = vld [vmem:[%s3 + $0x14] sm:$0xf]
    %v593 = vld [vmem:[%s3 + $0x18] sm:$0xf]
    %v594 = vld [vmem:[%s3 + $0x1c] sm:$0xf]
    %v595 = vld [vmem:[%s3 + $0x20] sm:$0xf]
    %v596 = vld [vmem:[%s3 + $0x24] sm:$0xf]
    %v597 = vld [vmem:[%s3 + $0x28] sm:$0xf]
    %v598 = vld [vmem:[%s3 + $0x2c] sm:$0xf]
    %v599 = vld [vmem:[%s3 + $0x30] sm:$0xf]
    %v600 = vld [vmem:[%s3 + $0x34] sm:$0xf]
    %v601 = vld [vmem:[%s3 + $0x38] sm:$0xf]
    %v602 = vld [vmem:[%s3 + $0x3c] sm:$0xf]
    %v603 = vld [vmem:[%s4] sm:$0x1]
    %v605 = vperm.slane %v603, 0
    %v623 = vunpack.c.l.b16 %v587
    %v624 = vunpack.c.l.b16 %v588
    %v625 = vunpack.c.l.b16 %v589
    %v626 = vunpack.c.l.b16 %v590
    %v627 = vunpack.c.l.b16 %v591
    %v628 = vunpack.c.l.b16 %v592
    %v629 = vunpack.c.l.b16 %v593
    %v630 = vunpack.c.l.b16 %v594
    %v631 = vunpack.c.l.b16 %v595
    %v632 = vunpack.c.l.b16 %v596
    %v633 = vunpack.c.l.b16 %v597
    %v634 = vunpack.c.l.b16 %v598
    %v635 = vunpack.c.l.b16 %v599
    %v636 = vunpack.c.l.b16 %v600
    %v637 = vunpack.c.l.b16 %v601
    %v638 = vunpack.c.l.b16 %v602
    %v639 = vpack.c.b16 %v624, %v623
    %v640 = vpack.c.b16 %v626, %v625
    %v641 = vpack.c.b16 %v628, %v627
    %v642 = vpack.c.b16 %v630, %v629
    %v643 = vpack.c.b16 %v632, %v631
    %v644 = vpack.c.b16 %v634, %v633
    %v645 = vpack.c.b16 %v636, %v635
    %v646 = vpack.c.b16 %v638, %v637
    %655 = vmatpush.bf16.msra.mxu0 %v646
    %656 = vmatpush.bf16.msra.mxu0 %v645
    %657 = vmatpush.bf16.msra.mxu0 %v644
    %658 = vmatpush.bf16.msra.mxu0 %v643
    %659 = vmatpush.bf16.msra.mxu0 %v642
    %660 = vmatpush.bf16.msra.mxu0 %v641
    %661 = vmatpush.bf16.msra.mxu0 %v640
    %662 = vmatpush.bf16.msra.mxu0 %v639
    %663 = vmatmul.bf16.gmra.mxu0 %v586
    %v664 = vpop.f32.mrf.mxu0
    %v665 = vadd.f32 %v605, %v664
    %v666 = vpop.f32.mrf.mxu0
    %667 = vdwg.mxu0
    %v668 = vpack.c.bf16 %v665, %v665
    %v669 = vld [vmem:[%s5] sm:$0xf]
    %v670 = vld [vmem:[%s5 + $0x4] sm:$0xf]
    %v671 = vld [vmem:[%s5 + $0x8] sm:$0xf]
    %v672 = vld [vmem:[%s5 + $0xc] sm:$0xf]
    %v673 = vld [vmem:[%s6] sm:$0x1]
    %v675 = vperm.slane %v673, 0
    %v681 = vunpack.c.l.b16 %v669
    %v682 = vunpack.c.l.b16 %v670
    %v683 = vunpack.c.l.b16 %v671
    %v684 = vunpack.c.l.b16 %v672
    %v685 = vpack.c.b16 %v682, %v681
    %v686 = vpack.c.b16 %v684, %v683
    %vm689 = vcmask 261120
    %v691 = vsel %vm689, %v668, 0
    %693 = vmatpush.bf16.msra.mxu0 0
    %694 = vmatpush.bf16.msra.mxu0 0
    %695 = vmatpush.bf16.msra.mxu0 0
    %696 = vmatpush.bf16.msra.mxu0 0
    %697 = vmatpush.bf16.msra.mxu0 0
    %698 = vmatpush.bf16.msra.mxu0 0
    %699 = vmatpush.bf16.msra.mxu0 %v686
    %700 = vmatpush.bf16.msra.mxu0 %v685
    %701 = vmatmul.bf16.gmra.mxu0 %v691
    %v702 = vpop.f32.mrf.mxu0
    %v703 = vadd.f32 %v675, %v702
    %v704 = vpop.f32.mrf.mxu0
    %705 = vdwg.mxu0
    %v706 = vmax.f32 %v703, 0.0
    %v707 = vpack.c.bf16 %v706, %v706
    %v708 = vld [vmem:[#allocation5] sm:$0xff]
    %v709 = vld [vmem:[#allocation5 + $0x8] sm:$0xff]
    %v710 = vld [vmem:[#allocation5 + $0x10] sm:$0xff]
    %v711 = vld [vmem:[#allocation5 + $0x18] sm:$0xf]
    %v712 = vld [vmem:[#allocation5 + $0x1c] sm:$0xff]
    %v713 = vld [vmem:[#allocation5 + $0x24] sm:$0xff]
    %v714 = vld [vmem:[#allocation5 + $0x2c] sm:$0xff]
    %v715 = vld [vmem:[#allocation5 + $0x34] sm:$0xf]
    %v716 = vld [vmem:[#allocation5 + $0x38] sm:$0xff]
    %v717 = vld [vmem:[#allocation5 + $0x40] sm:$0xff]
    %v718 = vld [vmem:[#allocation5 + $0x48] sm:$0xff]
    %v719 = vld [vmem:[#allocation5 + $0x50] sm:$0xf]
    %v720 = vld [vmem:[#allocation5 + $0x54] sm:$0xff]
    %v721 = vld [vmem:[#allocation5 + $0x5c] sm:$0xff]
    %v722 = vld [vmem:[#allocation5 + $0x64] sm:$0xff]
    %v723 = vld [vmem:[#allocation5 + $0x6c] sm:$0xf]
    %v724 = vld [vmem:[#allocation5 + $0x70] sm:$0xff]
    %v725 = vld [vmem:[#allocation5 + $0x78] sm:$0xff]
    %v726 = vld [vmem:[#allocation5 + $0x80] sm:$0xff]
    %v727 = vld [vmem:[#allocation5 + $0x88] sm:$0xf]
    %v728 = vld [vmem:[#allocation5 + $0x8c] sm:$0xff]
    %v729 = vld [vmem:[#allocation5 + $0x94] sm:$0xff]
    %v730 = vld [vmem:[#allocation5 + $0x9c] sm:$0xff]
    %v731 = vld [vmem:[#allocation5 + $0xa4] sm:$0xf]
    %v732 = vld [vmem:[#allocation5 + $0xa8] sm:$0xff]
    %v733 = vld [vmem:[#allocation5 + $0xb0] sm:$0xff]
    %v734 = vld [vmem:[#allocation5 + $0xb8] sm:$0xff]
    %v735 = vld [vmem:[#allocation5 + $0xc0] sm:$0xf]
    %v736 = vld [vmem:[#allocation5 + $0xc4] sm:$0xff]
    %v737 = vld [vmem:[#allocation5 + $0xcc] sm:$0xff]
    %v738 = vld [vmem:[#allocation5 + $0xd4] sm:$0xff]
    %v739 = vld [vmem:[#allocation5 + $0xdc] sm:$0xf]
    %v740 = vld [vmem:[#allocation5 + $0xe0] sm:$0xff]
    %v741 = vld [vmem:[#allocation5 + $0xe8] sm:$0xff]
    %v742 = vld [vmem:[#allocation5 + $0xf0] sm:$0xff]
    %v743 = vld [vmem:[#allocation5 + $0xf8] sm:$0xf]
    %v744 = vld [vmem:[#allocation5 + $0xfc] sm:$0xff]
    %v745 = vld [vmem:[#allocation5 + $0x104] sm:$0xff]
    %v746 = vld [vmem:[#allocation5 + $0x10c] sm:$0xff]
    %v747 = vld [vmem:[#allocation5 + $0x114] sm:$0xf]
    %v748 = vld [vmem:[#allocation5 + $0x118] sm:$0xff]
    %v749 = vld [vmem:[#allocation5 + $0x120] sm:$0xff]
    %v750 = vld [vmem:[#allocation5 + $0x128] sm:$0xff]
    %v751 = vld [vmem:[#allocation5 + $0x130] sm:$0xf]
    %v752 = vld [vmem:[#allocation5 + $0x134] sm:$0xff]
    %v753 = vld [vmem:[#allocation5 + $0x13c] sm:$0xff]
    %v754 = vld [vmem:[#allocation5 + $0x144] sm:$0xff]
    %v755 = vld [vmem:[#allocation5 + $0x14c] sm:$0xf]
    %v756 = vld [vmem:[#allocation5 + $0x150] sm:$0xff]
    %v757 = vld [vmem:[#allocation5 + $0x158] sm:$0xff]
    %v758 = vld [vmem:[#allocation5 + $0x160] sm:$0xff]
    %v759 = vld [vmem:[#allocation5 + $0x168] sm:$0xf]
    %v760 = vld [vmem:[#allocation5 + $0x16c] sm:$0xff]
    %v761 = vld [vmem:[#allocation5 + $0x174] sm:$0xff]
    %v762 = vld [vmem:[#allocation5 + $0x17c] sm:$0xff]
    %v763 = vld [vmem:[#allocation5 + $0x184] sm:$0xf]
    %v764 = vld [vmem:[#allocation5 + $0x188] sm:$0xff]
    %v765 = vld [vmem:[#allocation5 + $0x190] sm:$0xff]
    %v766 = vld [vmem:[#allocation5 + $0x198] sm:$0xff]
    %v767 = vld [vmem:[#allocation5 + $0x1a0] sm:$0xf]
    %v768 = vld [vmem:[#allocation5 + $0x1a4] sm:$0xff]
    %v769 = vld [vmem:[#allocation5 + $0x1ac] sm:$0xff]
    %v770 = vld [vmem:[#allocation5 + $0x1b4] sm:$0xff]
    %v771 = vld [vmem:[#allocation5 + $0x1bc] sm:$0xf]
    %v772 = vld [vmem:[%s8] sm:$0xff]
    %v774 = vperm.slane %v772, 0
    %v775 = vperm.slane %v772, 1
    %v776 = vperm.slane %v772, 2
    %v777 = vperm.slane %v772, 3
    %v778 = vperm.slane %v772, 4
    %v779 = vperm.slane %v772, 5
    %v780 = vperm.slane %v772, 6
    %v852 = vunpack.c.l.b16 %v708
    %v853 = vunpack.c.h.b16 %v708
    %v854 = vunpack.c.l.b16 %v709
    %v855 = vunpack.c.h.b16 %v709
    %v856 = vunpack.c.l.b16 %v710
    %v857 = vunpack.c.h.b16 %v710
    %v858 = vunpack.c.l.b16 %v711
    %v859 = vunpack.c.l.b16 %v712
    %v860 = vunpack.c.h.b16 %v712
    %v861 = vunpack.c.l.b16 %v713
    %v862 = vunpack.c.h.b16 %v713
    %v863 = vunpack.c.l.b16 %v714
    %v864 = vunpack.c.h.b16 %v714
    %v865 = vunpack.c.l.b16 %v715
    %v866 = vunpack.c.l.b16 %v716
    %v867 = vunpack.c.h.b16 %v716
    %v868 = vunpack.c.l.b16 %v717
    %v869 = vunpack.c.h.b16 %v717
    %v870 = vunpack.c.l.b16 %v718
    %v871 = vunpack.c.h.b16 %v718
    %v872 = vunpack.c.l.b16 %v719
    %v873 = vunpack.c.l.b16 %v720
    %v874 = vunpack.c.h.b16 %v720
    %v875 = vunpack.c.l.b16 %v721
    %v876 = vunpack.c.h.b16 %v721
    %v877 = vunpack.c.l.b16 %v722
    %v878 = vunpack.c.h.b16 %v722
    %v879 = vunpack.c.l.b16 %v723
    %v880 = vunpack.c.l.b16 %v724
    %v881 = vunpack.c.h.b16 %v724
    %v882 = vunpack.c.l.b16 %v725
    %v883 = vunpack.c.h.b16 %v725
    %v884 = vunpack.c.l.b16 %v726
    %v885 = vunpack.c.h.b16 %v726
    %v886 = vunpack.c.l.b16 %v727
    %v887 = vunpack.c.l.b16 %v728
    %v888 = vunpack.c.h.b16 %v728
    %v889 = vunpack.c.l.b16 %v729
    %v890 = vunpack.c.h.b16 %v729
    %v891 = vunpack.c.l.b16 %v730
    %v892 = vunpack.c.h.b16 %v730
    %v893 = vunpack.c.l.b16 %v731
    %v894 = vunpack.c.l.b16 %v732
    %v895 = vunpack.c.h.b16 %v732
    %v896 = vunpack.c.l.b16 %v733
    %v897 = vunpack.c.h.b16 %v733
    %v898 = vunpack.c.l.b16 %v734
    %v899 = vunpack.c.h.b16 %v734
    %v900 = vunpack.c.l.b16 %v735
    %v901 = vunpack.c.l.b16 %v736
    %v902 = vunpack.c.h.b16 %v736
    %v903 = vunpack.c.l.b16 %v737
    %v904 = vunpack.c.h.b16 %v737
    %v905 = vunpack.c.l.b16 %v738
    %v906 = vunpack.c.h.b16 %v738
    %v907 = vunpack.c.l.b16 %v739
    %v908 = vunpack.c.l.b16 %v740
    %v909 = vunpack.c.h.b16 %v740
    %v910 = vunpack.c.l.b16 %v741
    %v911 = vunpack.c.h.b16 %v741
    %v912 = vunpack.c.l.b16 %v742
    %v913 = vunpack.c.h.b16 %v742
    %v914 = vunpack.c.l.b16 %v743
    %v915 = vunpack.c.l.b16 %v744
    %v916 = vunpack.c.h.b16 %v744
    %v917 = vunpack.c.l.b16 %v745
    %v918 = vunpack.c.h.b16 %v745
    %v919 = vunpack.c.l.b16 %v746
    %v920 = vunpack.c.h.b16 %v746
    %v921 = vunpack.c.l.b16 %v747
    %v922 = vunpack.c.l.b16 %v748
    %v923 = vunpack.c.h.b16 %v748
    %v924 = vunpack.c.l.b16 %v749
    %v925 = vunpack.c.h.b16 %v749
    %v926 = vunpack.c.l.b16 %v750
    %v927 = vunpack.c.h.b16 %v750
    %v928 = vunpack.c.l.b16 %v751
    %v929 = vunpack.c.l.b16 %v752
    %v930 = vunpack.c.h.b16 %v752
    %v931 = vunpack.c.l.b16 %v753
    %v932 = vunpack.c.h.b16 %v753
    %v933 = vunpack.c.l.b16 %v754
    %v934 = vunpack.c.h.b16 %v754
    %v935 = vunpack.c.l.b16 %v755
    %v936 = vunpack.c.l.b16 %v756
    %v937 = vunpack.c.h.b16 %v756
    %v938 = vunpack.c.l.b16 %v757
    %v939 = vunpack.c.h.b16 %v757
    %v940 = vunpack.c.l.b16 %v758
    %v941 = vunpack.c.h.b16 %v758
    %v942 = vunpack.c.l.b16 %v759
    %v943 = vunpack.c.l.b16 %v760
    %v944 = vunpack.c.h.b16 %v760
    %v945 = vunpack.c.l.b16 %v761
    %v946 = vunpack.c.h.b16 %v761
    %v947 = vunpack.c.l.b16 %v762
    %v948 = vunpack.c.h.b16 %v762
    %v949 = vunpack.c.l.b16 %v763
    %v950 = vunpack.c.l.b16 %v764
    %v951 = vunpack.c.h.b16 %v764
    %v952 = vunpack.c.l.b16 %v765
    %v953 = vunpack.c.h.b16 %v765
    %v954 = vunpack.c.l.b16 %v766
    %v955 = vunpack.c.h.b16 %v766
    %v956 = vunpack.c.l.b16 %v767
    %v957 = vunpack.c.l.b16 %v768
    %v958 = vunpack.c.h.b16 %v768
    %v959 = vunpack.c.l.b16 %v769
    %v960 = vunpack.c.h.b16 %v769
    %v961 = vunpack.c.l.b16 %v770
    %v962 = vunpack.c.h.b16 %v770
    %v963 = vunpack.c.l.b16 %v771
    %v964 = vpack.c.b16 %v859, %v852
    %v965 = vpack.c.b16 %v860, %v853
    %v966 = vpack.c.b16 %v861, %v854
    %v967 = vpack.c.b16 %v862, %v855
    %v968 = vpack.c.b16 %v863, %v856
    %v969 = vpack.c.b16 %v864, %v857
    %v970 = vpack.c.b16 %v865, %v858
    %v971 = vpack.c.b16 %v873, %v866
    %v972 = vpack.c.b16 %v874, %v867
    %v973 = vpack.c.b16 %v875, %v868
    %v974 = vpack.c.b16 %v876, %v869
    %v975 = vpack.c.b16 %v877, %v870
    %v976 = vpack.c.b16 %v878, %v871
    %v977 = vpack.c.b16 %v879, %v872
    %v978 = vpack.c.b16 %v887, %v880
    %v979 = vpack.c.b16 %v888, %v881
    %v980 = vpack.c.b16 %v889, %v882
    %v981 = vpack.c.b16 %v890, %v883
    %v982 = vpack.c.b16 %v891, %v884
    %v983 = vpack.c.b16 %v892, %v885
    %v984 = vpack.c.b16 %v893, %v886
    %v985 = vpack.c.b16 %v901, %v894
    %v986 = vpack.c.b16 %v902, %v895
    %v987 = vpack.c.b16 %v903, %v896
    %v988 = vpack.c.b16 %v904, %v897
    %v989 = vpack.c.b16 %v905, %v898
    %v990 = vpack.c.b16 %v906, %v899
    %v991 = vpack.c.b16 %v907, %v900
    %v992 = vpack.c.b16 %v915, %v908
    %v993 = vpack.c.b16 %v916, %v909
    %v994 = vpack.c.b16 %v917, %v910
    %v995 = vpack.c.b16 %v918, %v911
    %v996 = vpack.c.b16 %v919, %v912
    %v997 = vpack.c.b16 %v920, %v913
    %v998 = vpack.c.b16 %v921, %v914
    %v999 = vpack.c.b16 %v929, %v922
    %v1000 = vpack.c.b16 %v930, %v923
    %v1001 = vpack.c.b16 %v931, %v924
    %v1002 = vpack.c.b16 %v932, %v925
    %v1003 = vpack.c.b16 %v933, %v926
    %v1004 = vpack.c.b16 %v934, %v927
    %v1005 = vpack.c.b16 %v935, %v928
    %v1006 = vpack.c.b16 %v943, %v936
    %v1007 = vpack.c.b16 %v944, %v937
    %v1008 = vpack.c.b16 %v945, %v938
    %v1009 = vpack.c.b16 %v946, %v939
    %v1010 = vpack.c.b16 %v947, %v940
    %v1011 = vpack.c.b16 %v948, %v941
    %v1012 = vpack.c.b16 %v949, %v942
    %v1013 = vpack.c.b16 %v957, %v950
    %v1014 = vpack.c.b16 %v958, %v951
    %v1015 = vpack.c.b16 %v959, %v952
    %v1016 = vpack.c.b16 %v960, %v953
    %v1017 = vpack.c.b16 %v961, %v954
    %v1018 = vpack.c.b16 %v962, %v955
    %v1019 = vpack.c.b16 %v963, %v956
    %1076 = vmatpush.bf16.msra.mxu0 %v1013
    %1077 = vmatpush.bf16.msra.mxu0 %v1006
    %1078 = vmatpush.bf16.msra.mxu0 %v999
    %1079 = vmatpush.bf16.msra.mxu0 %v992
    %1080 = vmatpush.bf16.msra.mxu0 %v985
    %1081 = vmatpush.bf16.msra.mxu0 %v978
    %1082 = vmatpush.bf16.msra.mxu0 %v971
    %1083 = vmatpush.bf16.msra.mxu0 %v964
    %1084 = vmatmul.bf16.gmra.mxu0 %v707
    %v1085 = vpop.f32.mrf.mxu0
    %v1086 = vadd.f32 %v774, %v1085
    %v1087 = vpop.f32.mrf.mxu0
    %1088 = vdwg.mxu0
    %1089 = vmatpush.bf16.msra.mxu0 %v1014
    %1090 = vmatpush.bf16.msra.mxu0 %v1007
    %1091 = vmatpush.bf16.msra.mxu0 %v1000
    %1092 = vmatpush.bf16.msra.mxu0 %v993
    %1093 = vmatpush.bf16.msra.mxu0 %v986
    %1094 = vmatpush.bf16.msra.mxu0 %v979
    %1095 = vmatpush.bf16.msra.mxu0 %v972
    %1096 = vmatpush.bf16.msra.mxu0 %v965
    %1097 = vmatmul.bf16.gmra.mxu0 %v707
    %v1098 = vpop.f32.mrf.mxu0
    %v1099 = vadd.f32 %v775, %v1098
    %v1100 = vpop.f32.mrf.mxu0
    %1101 = vdwg.mxu0
    %1102 = vmatpush.bf16.msra.mxu0 %v1015
    %1103 = vmatpush.bf16.msra.mxu0 %v1008
    %1104 = vmatpush.bf16.msra.mxu0 %v1001
    %1105 = vmatpush.bf16.msra.mxu0 %v994
    %1106 = vmatpush.bf16.msra.mxu0 %v987
    %1107 = vmatpush.bf16.msra.mxu0 %v980
    %1108 = vmatpush.bf16.msra.mxu0 %v973
    %1109 = vmatpush.bf16.msra.mxu0 %v966
    %1110 = vmatmul.bf16.gmra.mxu0 %v707
    %v1111 = vpop.f32.mrf.mxu0
    %v1112 = vadd.f32 %v776, %v1111
    %v1113 = vpop.f32.mrf.mxu0
    %1114 = vdwg.mxu0
    %1115 = vmatpush.bf16.msra.mxu0 %v1016
    %1116 = vmatpush.bf16.msra.mxu0 %v1009
    %1117 = vmatpush.bf16.msra.mxu0 %v1002
    %1118 = vmatpush.bf16.msra.mxu0 %v995
    %1119 = vmatpush.bf16.msra.mxu0 %v988
    %1120 = vmatpush.bf16.msra.mxu0 %v981
    %1121 = vmatpush.bf16.msra.mxu0 %v974
    %1122 = vmatpush.bf16.msra.mxu0 %v967
    %1123 = vmatmul.bf16.gmra.mxu0 %v707
    %v1124 = vpop.f32.mrf.mxu0
    %v1125 = vadd.f32 %v777, %v1124
    %v1126 = vpop.f32.mrf.mxu0
    %1127 = vdwg.mxu0
    %1128 = vmatpush.bf16.msra.mxu0 %v1017
    %1129 = vmatpush.bf16.msra.mxu0 %v1010
    %1130 = vmatpush.bf16.msra.mxu0 %v1003
    %1131 = vmatpush.bf16.msra.mxu0 %v996
    %1132 = vmatpush.bf16.msra.mxu0 %v989
    %1133 = vmatpush.bf16.msra.mxu0 %v982
    %1134 = vmatpush.bf16.msra.mxu0 %v975
    %1135 = vmatpush.bf16.msra.mxu0 %v968
    %1136 = vmatmul.bf16.gmra.mxu0 %v707
    %v1137 = vpop.f32.mrf.mxu0
    %v1138 = vadd.f32 %v778, %v1137
    %v1139 = vpop.f32.mrf.mxu0
    %1140 = vdwg.mxu0
    %1141 = vmatpush.bf16.msra.mxu0 %v1018
    %1142 = vmatpush.bf16.msra.mxu0 %v1011
    %1143 = vmatpush.bf16.msra.mxu0 %v1004
    %1144 = vmatpush.bf16.msra.mxu0 %v997
    %1145 = vmatpush.bf16.msra.mxu0 %v990
    %1146 = vmatpush.bf16.msra.mxu0 %v983
    %1147 = vmatpush.bf16.msra.mxu0 %v976
    %1148 = vmatpush.bf16.msra.mxu0 %v969
    %1149 = vmatmul.bf16.gmra.mxu0 %v707
    %v1150 = vpop.f32.mrf.mxu0
    %v1151 = vadd.f32 %v779, %v1150
    %v1152 = vpop.f32.mrf.mxu0
    %1153 = vdwg.mxu0
    %1154 = vmatpush.bf16.msra.mxu0 %v1019
    %1155 = vmatpush.bf16.msra.mxu0 %v1012
    %1156 = vmatpush.bf16.msra.mxu0 %v1005
    %1157 = vmatpush.bf16.msra.mxu0 %v998
    %1158 = vmatpush.bf16.msra.mxu0 %v991
    %1159 = vmatpush.bf16.msra.mxu0 %v984
    %1160 = vmatpush.bf16.msra.mxu0 %v977
    %1161 = vmatpush.bf16.msra.mxu0 %v970
    %1162 = vmatmul.bf16.gmra.mxu0 %v707
    %v1163 = vpop.f32.mrf.mxu0
    %v1164 = vadd.f32 %v780, %v1163
    %v1165 = vpop.f32.mrf.mxu0
    %1166 = vdwg.mxu0
    %1167 = vst [vmem:[#allocation7] sm:$0xff] %v1086
    %1168 = vst [vmem:[#allocation7 + $0x8] sm:$0xff] %v1099
    %1169 = vst [vmem:[#allocation7 + $0x10] sm:$0xff] %v1112
    %1170 = vst [vmem:[#allocation7 + $0x18] sm:$0xff] %v1125
    %1171 = vst [vmem:[#allocation7 + $0x20] sm:$0xff] %v1138
    %1172 = vst [vmem:[#allocation7 + $0x28] sm:$0xff] %v1151
    %1173 = vst [vmem:[#allocation7 + $0x30] sm:$0xff] %v1164
    // Predicated region
    $region46: #{tpu_custom_call.1} parent=1 // pred_check
      _
    $region47: #{tpu_custom_call.1} parent=1 // pred_check_branch
      %1175 = sbr.rel (0) target = $region49
    $region48: #{tpu_custom_call.1} parent=1 // pred_region
      %1177 = vsyncadd [#allocation4], 0
      %s1179 = sshll.u32 [#allocation7], 4
      %s1180 = int_to_ptr.vmem [resolvable:$true] %s1179
      %s1181 = sshll.u32 %s9, 4
      %s1182 = int_to_ptr.hbm [resolvable:$true] %s1181
      %1184 = dma.vmem_to_hbm [thread:$0]  %s1180, 896, %s1182, [#allocation4]
    $region49: #{tpu_custom_call.1} parent=1 // pred_fallthru
      _
    // Predicated region
    $region50: #{tpu_custom_call.1} parent=1 // pred_check
      _
    $region51: #{tpu_custom_call.1} parent=1 // pred_check_branch
      %1186 = sbr.rel (0) target = $region53
    $region52: #{tpu_custom_call.1} parent=1 // pred_region
      %1188 = dma.done [#allocation4], 896
    $region53: #{tpu_custom_call.1} parent=1 // pred_fallthru
      _
    %1189 = vsyncpa [#allocation3], 1
    %1190 = vsyncpa [#allocation6], 1
    %1191 = vsyncpa [#allocation4], 1

</llo_original>
